<compile_context>
chip_gen: v6e
topology: v6e:2x2x1
jax: 0.10.0
libtpu: 0.0.40
codegen_flags: <defaults>
</compile_context>

<pallas_src>
import functools

import jax
import jax.numpy as jnp
from jax.experimental import pallas as pl
from jax.experimental.pallas import tpu as pltpu

_LANE = 128
_SUBLANE = 8


def _round_up(x: int, m: int) -> int:
    return ((x + m - 1) // m) * m


def decoder_kernel(x_ref, w3_ref, b3_ref, w4_ref, b4_ref, out_ref):
    # x:   [TILE_B, latent_dim]
    # w3:  [latent_dim, Hp]   b3: [1, Hp]      (Hp = hidden padded to 128)
    # w4:  [Hp, output_dim]   b4: [1, output_dim]
    # out: [TILE_B, output_dim]
    x = x_ref[...].astype(w3_ref.dtype)          # no-op cast for f32 default
    h = jnp.dot(x, w3_ref[...], preferred_element_type=jnp.float32) + b3_ref[...]
    y = jnp.tanh(h)                              # f32 activation
    out = jnp.dot(y.astype(w4_ref.dtype), w4_ref[...],
                  preferred_element_type=jnp.float32) + b4_ref[...]
    out_ref[...] = out.astype(out_ref.dtype)


@functools.partial(jax.jit, static_argnames=("tile_b", "compute_dtype"))
def decoder_forward(x, w3, b3, w4, b4, *, tile_b=16384,
                    compute_dtype=jnp.float32):
    """y = tanh(x @ w3 + b3) @ w4 + b4  (PyTorch Decoder forward).

    x:  [B, latent_dim]
    w3: [latent_dim, hidden]  b3: [1, hidden]   (hidden = 30)
    w4: [hidden, output_dim]  b4: [1, output_dim]
    """
    B, latent_dim = x.shape
    hidden = w3.shape[1]
    output_dim = w4.shape[1]

    # Pad only the (tiny, VMEM-resident) hidden dim to a lane multiple.
    # Zero padding is mathematically inert: tanh(0)=0, padded w4 rows are 0.
    hidden_p = _round_up(hidden, _LANE)
    w3p = jnp.pad(w3, ((0, 0), (0, hidden_p - hidden))).astype(compute_dtype)
    b3p = jnp.pad(b3, ((0, 0), (0, hidden_p - hidden))).astype(jnp.float32)
    w4p = jnp.pad(w4, ((0, hidden_p - hidden), (0, 0))).astype(compute_dtype)
    b4p = b4.astype(jnp.float32)

    # Batch tile: multiple of 8 (sublane), capped so v7x gets >= 2 grid steps.
    if B <= _SUBLANE:
        tb = B  # block == full array dim -> always legal, single step
    else:
        tb = max(_SUBLANE, min(tile_b, _round_up(pl.cdiv(B, 2), _SUBLANE)))
    grid = (pl.cdiv(B, tb),)   # boundary block may be partial; safe (masked)

    return pl.pallas_call(
        decoder_kernel,
        out_shape=jax.ShapeDtypeStruct((B, output_dim), jnp.float32),
        grid=grid,
        in_specs=[
            # streamed activations: new batch tile per grid step
            pl.BlockSpec((tb, latent_dim), lambda i: (i, 0)),
            # weights / biases: constant index_map -> VMEM-resident
            pl.BlockSpec((latent_dim, hidden_p), lambda i: (0, 0)),
            pl.BlockSpec((1, hidden_p), lambda i: (0, 0)),
            pl.BlockSpec((hidden_p, output_dim), lambda i: (0, 0)),
            pl.BlockSpec((1, output_dim), lambda i: (0, 0)),
        ],
        out_specs=pl.BlockSpec((tb, output_dim), lambda i: (i, 0)),
        compiler_params=pltpu.CompilerParams(
            dimension_semantics=("parallel",)),
    )(x, w3p, b3p, w4p, b4p)


def init_params(key, latent_dim, output_dim, hidden=30):
    # Deterministic synthetic parameters (uniform, like PyTorch default init).
    k1, k2, k3, k4 = jax.random.split(key, 4)
    bound3 = 1.0 / jnp.sqrt(latent_dim)
    bound4 = 1.0 / jnp.sqrt(hidden)
    # Stored pre-transposed: w3 is [latent_dim, hidden] so kernel does x @ w3.
    w3 = jax.random.uniform(k1, (latent_dim, hidden), jnp.float32, -bound3, bound3)
    b3 = jax.random.uniform(k2, (1, hidden), jnp.float32, -bound3, bound3)
    w4 = jax.random.uniform(k3, (hidden, output_dim), jnp.float32, -bound4, bound4)
    b4 = jax.random.uniform(k4, (1, output_dim), jnp.float32, -bound4, bound4)
    return w3, b3, w4, b4


def reference_forward(x, w3, b3, w4, b4):
    y = jnp.tanh(x @ w3 + b3)
    return y @ w4 + b4


if __name__ == "__main__":
    key = jax.random.PRNGKey(0)
    k_x, k_p, k_x2 = jax.random.split(key, 3)

    batch = 8
    latent_dim = 16
    output_dim = 32

    w3, b3, w4, b4 = init_params(k_p, latent_dim, output_dim)

    # --- small shape (matches the module's toy config) ----------------------
    x = jax.random.normal(k_x, (batch, latent_dim), jnp.float32)
    out = jax.block_until_ready(decoder_forward(x, w3, b3, w4, b4))
    ref = reference_forward(x, w3, b3, w4, b4)
    assert out.shape == (batch, output_dim)
    assert jnp.allclose(out, ref, atol=1e-5, rtol=1e-5), "mismatch vs reference (small)"

    # --- larger, non-tile-multiple batch: exercises tiling + partial block --
    big_batch = 4100
    x2 = jax.random.normal(k_x2, (big_batch, latent_dim), jnp.float32)
    out2 = jax.block_until_ready(decoder_forward(x2, w3, b3, w4, b4))
    ref2 = reference_forward(x2, w3, b3, w4, b4)
    assert out2.shape == (big_batch, output_dim)
    assert jnp.allclose(out2, ref2, atol=1e-5, rtol=1e-5), "mismatch vs reference (tiled)"

    print("KERNEL_OK")
</pallas_src>

<mosaic_0001>
module attributes {stable_mosaic.version = 11 : i64} {
  func.func @decoder_kernel(%arg0: i32, %arg1: memref<8x16xf32, #tpu.memory_space<vmem>>, %arg2: memref<16x128xf32, #tpu.memory_space<vmem>>, %arg3: memref<1x128xf32, #tpu.memory_space<vmem>>, %arg4: memref<128x32xf32, #tpu.memory_space<vmem>>, %arg5: memref<1x32xf32, #tpu.memory_space<vmem>>, %arg6: memref<8x32xf32, #tpu.memory_space<vmem>>) attributes {dimension_semantics = [#tpu.dimension_semantics<parallel>], iteration_bounds = array<i64: 1>, scalar_prefetch = 0 : i64, scratch_operands = 0 : i64, tpu.core_type = #tpu.core_type<tc>, window_params = [{transform_indices = @transform_0, window_bounds = array<i64: 8, 16>}, {pipeline_mode = #tpu.pipeline_mode<synchronous>, transform_indices = @transform_1, window_bounds = array<i64: 16, 128>}, {pipeline_mode = #tpu.pipeline_mode<synchronous>, transform_indices = @transform_2, window_bounds = array<i64: 1, 128>}, {pipeline_mode = #tpu.pipeline_mode<synchronous>, transform_indices = @transform_3, window_bounds = array<i64: 128, 32>}, {pipeline_mode = #tpu.pipeline_mode<synchronous>, transform_indices = @transform_4, window_bounds = array<i64: 1, 32>}, {transform_indices = @transform_5, window_bounds = array<i64: 8, 32>}]} {
    %c0 = arith.constant 0 : index
    %c0_0 = arith.constant 0 : index
    %0 = vector.load %arg1[%c0, %c0_0] : memref<8x16xf32, #tpu.memory_space<vmem>>, vector<8x16xf32>
    %c0_1 = arith.constant 0 : index
    %c0_2 = arith.constant 0 : index
    %1 = vector.load %arg2[%c0_1, %c0_2] : memref<16x128xf32, #tpu.memory_space<vmem>>, vector<16x128xf32>
    %cst = arith.constant dense<0.000000e+00> : vector<8x128xf32>
    %2 = tpu.matmul %0, %1, %cst {dimension_numbers = #tpu.dot_dimension_numbers<[1], [0], [0], [1], [0, 0, 1, 1], [], []>} : vector<8x16xf32>, vector<16x128xf32>, vector<8x128xf32> -> vector<8x128xf32>
    %c0_3 = arith.constant 0 : index
    %c0_4 = arith.constant 0 : index
    %3 = vector.load %arg3[%c0_3, %c0_4] : memref<1x128xf32, #tpu.memory_space<vmem>>, vector<1x128xf32>
    %4 = vector.broadcast %3 : vector<1x128xf32> to vector<8x128xf32>
    %5 = arith.addf %2, %4 : vector<8x128xf32>
    %6 = math.tanh %5 : vector<8x128xf32>
    %c0_5 = arith.constant 0 : index
    %c0_6 = arith.constant 0 : index
    %7 = vector.load %arg4[%c0_5, %c0_6] : memref<128x32xf32, #tpu.memory_space<vmem>>, vector<128x32xf32>
    %cst_7 = arith.constant dense<0.000000e+00> : vector<8x32xf32>
    %8 = tpu.matmul %6, %7, %cst_7 {dimension_numbers = #tpu.dot_dimension_numbers<[1], [0], [0], [1], [0, 0, 1, 1], [], []>} : vector<8x128xf32>, vector<128x32xf32>, vector<8x32xf32> -> vector<8x32xf32>
    %c0_8 = arith.constant 0 : index
    %c0_9 = arith.constant 0 : index
    %9 = vector.load %arg5[%c0_8, %c0_9] : memref<1x32xf32, #tpu.memory_space<vmem>>, vector<1x32xf32>
    %10 = vector.broadcast %9 : vector<1x32xf32> to vector<8x32xf32>
    %11 = arith.addf %8, %10 : vector<8x32xf32>
    %c0_10 = arith.constant 0 : index
    %c0_11 = arith.constant 0 : index
    %12 = vector.load %arg6[%c0_10, %c0_11] : memref<8x32xf32, #tpu.memory_space<vmem>>, vector<8x32xf32>
    tpu.vector_store %arg6[%c0_10, %c0_11], %11 {strides = array<i32>} : memref<8x32xf32, #tpu.memory_space<vmem>>, vector<8x32xf32>,
    return
  }
  func.func @transform_0(%arg0: i32) -> (i32, i32) {
    %c0_i32 = arith.constant 0 : i32
    %c0_i32_0 = arith.constant 0 : i32
    return %arg0, %c0_i32 : i32, i32
  }
  func.func @transform_1(%arg0: i32) -> (i32, i32) {
    %c0_i32 = arith.constant 0 : i32
    %c0_i32_0 = arith.constant 0 : i32
    %c0_i32_1 = arith.constant 0 : i32
    return %c0_i32, %c0_i32_0 : i32, i32
  }
  func.func @transform_2(%arg0: i32) -> (i32, i32) {
    %c0_i32 = arith.constant 0 : i32
    %c0_i32_0 = arith.constant 0 : i32
    %c0_i32_1 = arith.constant 0 : i32
    return %c0_i32, %c0_i32_0 : i32, i32
  }
  func.func @transform_3(%arg0: i32) -> (i32, i32) {
    %c0_i32 = arith.constant 0 : i32
    %c0_i32_0 = arith.constant 0 : i32
    %c0_i32_1 = arith.constant 0 : i32
    return %c0_i32, %c0_i32_0 : i32, i32
  }
  func.func @transform_4(%arg0: i32) -> (i32, i32) {
    %c0_i32 = arith.constant 0 : i32
    %c0_i32_0 = arith.constant 0 : i32
    %c0_i32_1 = arith.constant 0 : i32
    return %c0_i32, %c0_i32_0 : i32, i32
  }
  func.func @transform_5(%arg0: i32) -> (i32, i32) {
    %c0_i32 = arith.constant 0 : i32
    %c0_i32_0 = arith.constant 0 : i32
    return %arg0, %c0_i32 : i32, i32
  }
}

</mosaic_0001>

<llo_original>
// kernel: decoder_forward.1
$region0: #{decoder_forward.1}
  #allocation0 [shape = 'u32[]', space=smem, size = 0x4, offset = 0x4, fixed_abs, tag = 'smem constant byte address 0x4 - core index']
  #allocation1 [shape = 'u32[144,128]{1,0:T(1,128)}', space=vmem, size = 0x12000, scoped, tag = 'internal scratch']
  %s0 = inlined_call_operand.vmem [shape: f32[8,16], index: 0, kind: input, shape index: {}]
  %s1 = inlined_call_operand.vmem [shape: f32[16,128], index: 1, kind: input, shape index: {}]
  %s2 = inlined_call_operand.vmem [shape: f32[1,128], index: 2, kind: input, shape index: {}]
  %s3 = inlined_call_operand.vmem [shape: f32[128,32], index: 3, kind: input, shape index: {}]
  %s4 = inlined_call_operand.vmem [shape: f32[1,32], index: 4, kind: input, shape index: {}]
  %s5 = inlined_call_operand.hbm [shape: f32[8,32], index: 5, kind: output, shape index: {}]
  %s6 = sld [smem:[#allocation0]]
  $region30: #{decoder_forward.1} parent=0
    _
  %s8 = ssub.s32 1, %s6
  %s9 = scalar_select 0, %s8, %s6
  $region1: #{decoder_forward.1} parent=0
    #allocation2 [shape = 'u8[4096]{0}', space=vmem, size = 0x1000, scoped, tag = 'output window, operand 0, single buffered']
    #allocation3 [shape = 's32[1]{0}', space=sflag, size = 0x4, scoped, tag = 'scoped memory for decoder_forward.1']
    %10 = vsyncpa [#allocation3], 0
    // Predicated region
    $region2: #{decoder_forward.1} parent=1 // pred_check
      _
    $region3: #{decoder_forward.1} parent=1 // pred_check_branch
      %12 = sbr.rel (0) target = $region5
    $region4: #{decoder_forward.1} parent=1 // pred_region
      _
    $region5: #{decoder_forward.1} parent=1 // pred_fallthru
      _
    // Predicated region
    $region6: #{decoder_forward.1} parent=1 // pred_check
      _
    $region7: #{decoder_forward.1} parent=1 // pred_check_branch
      %14 = sbr.rel (0) target = $region9
    $region8: #{decoder_forward.1} parent=1 // pred_region
      _
    $region9: #{decoder_forward.1} parent=1 // pred_fallthru
      _
    // Predicated region
    $region10: #{decoder_forward.1} parent=1 // pred_check
      _
    $region11: #{decoder_forward.1} parent=1 // pred_check_branch
      %16 = sbr.rel (0) target = $region13
    $region12: #{decoder_forward.1} parent=1 // pred_region
      _
    $region13: #{decoder_forward.1} parent=1 // pred_fallthru
      _
    // Predicated region
    $region14: #{decoder_forward.1} parent=1 // pred_check
      _
    $region15: #{decoder_forward.1} parent=1 // pred_check_branch
      %18 = sbr.rel (0) target = $region17
    $region16: #{decoder_forward.1} parent=1 // pred_region
      _
    $region17: #{decoder_forward.1} parent=1 // pred_fallthru
      _
    // Predicated region
    $region18: #{decoder_forward.1} parent=1 // pred_check
      _
    $region19: #{decoder_forward.1} parent=1 // pred_check_branch
      %20 = sbr.rel (0) target = $region21
    $region20: #{decoder_forward.1} parent=1 // pred_region
      _
    $region21: #{decoder_forward.1} parent=1 // pred_fallthru
      _
    %v21 = vld [vmem:[%s0] sm:$0xff]
    %v22 = vld [vmem:[%s1] sm:$0xff]
    %v23 = vld [vmem:[%s1 + $0x8] sm:$0xff]
    %v24 = vld [vmem:[%s2] sm:$0x1]
    %v26 = vlaneseq
    %v27 = vshrl.u32 %v26, 7
    %v28 = vsub.s32 0, %v27
    %v29 = vrot.slane %v24, %v28
    %vm31 = vcmask 130048
    %v33 = vsel %vm31, %v21, 0
    %35 = vmatprep.subr.mxu0 0.0
    %36 = vmatpush1.msra.mxu0 0.0
    %37 = vmatprep.subr.mxu0 0.0
    %38 = vmatpush1.msra.mxu0 0.0
    %39 = vmatprep.subr.mxu0 0.0
    %40 = vmatpush1.msra.mxu0 0.0
    %41 = vmatprep.subr.mxu0 0.0
    %42 = vmatpush1.msra.mxu0 0.0
    %43 = vmatprep.subr.mxu0 0.0
    %44 = vmatpush1.msra.mxu0 0.0
    %45 = vmatprep.subr.mxu0 0.0
    %46 = vmatpush1.msra.mxu0 0.0
    %47 = vmatprep.subr.mxu0 0.0
    %48 = vmatpush1.msra.mxu0 0.0
    %49 = vmatprep.subr.mxu0 0.0
    %50 = vmatpush1.msra.mxu0 0.0
    %51 = vmatprep.subr.mxu0 0.0
    %52 = vmatpush1.msra.mxu0 0.0
    %53 = vmatprep.subr.mxu0 0.0
    %54 = vmatpush1.msra.mxu0 0.0
    %55 = vmatprep.subr.mxu0 0.0
    %56 = vmatpush1.msra.mxu0 0.0
    %57 = vmatprep.subr.mxu0 0.0
    %58 = vmatpush1.msra.mxu0 0.0
    %59 = vmatprep.subr.mxu0 0.0
    %60 = vmatpush1.msra.mxu0 0.0
    %61 = vmatprep.subr.mxu0 0.0
    %62 = vmatpush1.msra.mxu0 0.0
    %63 = vmatprep.subr.mxu0 0.0
    %64 = vmatpush1.msra.mxu0 %v23
    %65 = vmatprep.subr.mxu0 0.0
    %66 = vmatpush1.msra.mxu0 %v22
    %67 = vmatprep.subr.mxu0 0.0
    %68 = vmatpush2.msra.mxu0 0.0
    %69 = vmatprep.subr.mxu0 0.0
    %70 = vmatpush2.msra.mxu0 0.0
    %71 = vmatprep.subr.mxu0 0.0
    %72 = vmatpush2.msra.mxu0 0.0
    %73 = vmatprep.subr.mxu0 0.0
    %74 = vmatpush2.msra.mxu0 0.0
    %75 = vmatprep.subr.mxu0 0.0
    %76 = vmatpush2.msra.mxu0 0.0
    %77 = vmatprep.subr.mxu0 0.0
    %78 = vmatpush2.msra.mxu0 0.0
    %79 = vmatprep.subr.mxu0 0.0
    %80 = vmatpush2.msra.mxu0 0.0
    %81 = vmatprep.subr.mxu0 0.0
    %82 = vmatpush2.msra.mxu0 0.0
    %83 = vmatprep.subr.mxu0 0.0
    %84 = vmatpush2.msra.mxu0 0.0
    %85 = vmatprep.subr.mxu0 0.0
    %86 = vmatpush2.msra.mxu0 0.0
    %87 = vmatprep.subr.mxu0 0.0
    %88 = vmatpush2.msra.mxu0 0.0
    %89 = vmatprep.subr.mxu0 0.0
    %90 = vmatpush2.msra.mxu0 0.0
    %91 = vmatprep.subr.mxu0 0.0
    %92 = vmatpush2.msra.mxu0 0.0
    %93 = vmatprep.subr.mxu0 0.0
    %94 = vmatpush2.msra.mxu0 0.0
    %95 = vmatprep.subr.mxu0 0.0
    %96 = vmatpush2.msra.mxu0 0.0
    %97 = vmatprep.subr.mxu0 0.0
    %98 = vmatpush2.msra.mxu0 0.0
    %99 = vmatprep.mubr.f32.mxu0 0.0
    %100 = vmatmul.mubr.f32.gmra.mxu0 %v33
    %v101 = vpop.f32.mrf.mxu0
    %v102 = vadd.f32 %v29, %v101
    %v103 = vpop.f32.mrf.mxu0
    %104 = vdwg.mxu0
    %v105 = vtanh.pop %v102
    %v106 = vld [vmem:[%s3] sm:$0xff]
    %v107 = vld [vmem:[%s3 + $0x8] sm:$0xff]
    %v108 = vld [vmem:[%s3 + $0x10] sm:$0xff]
    %v109 = vld [vmem:[%s3 + $0x18] sm:$0xff]
    %v110 = vld [vmem:[%s3 + $0x20] sm:$0xff]
    %v111 = vld [vmem:[%s3 + $0x28] sm:$0xff]
    %v112 = vld [vmem:[%s3 + $0x30] sm:$0xff]
    %v113 = vld [vmem:[%s3 + $0x38] sm:$0xff]
    %v114 = vld [vmem:[%s3 + $0x40] sm:$0xff]
    %v115 = vld [vmem:[%s3 + $0x48] sm:$0xff]
    %v116 = vld [vmem:[%s3 + $0x50] sm:$0xff]
    %v117 = vld [vmem:[%s3 + $0x58] sm:$0xff]
    %v118 = vld [vmem:[%s3 + $0x60] sm:$0xff]
    %v119 = vld [vmem:[%s3 + $0x68] sm:$0xff]
    %v120 = vld [vmem:[%s3 + $0x70] sm:$0xff]
    %v121 = vld [vmem:[%s3 + $0x78] sm:$0xff]
    %v122 = vld [vmem:[%s4] sm:$0x1]
    %v124 = vlaneseq
    %v125 = vshrl.u32 %v124, 7
    %v126 = vsub.s32 0, %v125
    %v127 = vrot.slane %v122, %v126
    %129 = vmatprep.subr.mxu0 0.0
    %130 = vmatpush1.msra.mxu0 %v121
    %131 = vmatprep.subr.mxu0 0.0
    %132 = vmatpush1.msra.mxu0 %v120
    %133 = vmatprep.subr.mxu0 0.0
    %134 = vmatpush1.msra.mxu0 %v119
    %135 = vmatprep.subr.mxu0 0.0
    %136 = vmatpush1.msra.mxu0 %v118
    %137 = vmatprep.subr.mxu0 0.0
    %138 = vmatpush1.msra.mxu0 %v117
    %139 = vmatprep.subr.mxu0 0.0
    %140 = vmatpush1.msra.mxu0 %v116
    %141 = vmatprep.subr.mxu0 0.0
    %142 = vmatpush1.msra.mxu0 %v115
    %143 = vmatprep.subr.mxu0 0.0
    %144 = vmatpush1.msra.mxu0 %v114
    %145 = vmatprep.subr.mxu0 0.0
    %146 = vmatpush1.msra.mxu0 %v113
    %147 = vmatprep.subr.mxu0 0.0
    %148 = vmatpush1.msra.mxu0 %v112
    %149 = vmatprep.subr.mxu0 0.0
    %150 = vmatpush1.msra.mxu0 %v111
    %151 = vmatprep.subr.mxu0 0.0
    %152 = vmatpush1.msra.mxu0 %v110
    %153 = vmatprep.subr.mxu0 0.0
    %154 = vmatpush1.msra.mxu0 %v109
    %155 = vmatprep.subr.mxu0 0.0
    %156 = vmatpush1.msra.mxu0 %v108
    %157 = vmatprep.subr.mxu0 0.0
    %158 = vmatpush1.msra.mxu0 %v107
    %159 = vmatprep.subr.mxu0 0.0
    %160 = vmatpush1.msra.mxu0 %v106
    %161 = vmatprep.subr.mxu0 0.0
    %162 = vmatpush2.msra.mxu0 0.0
    %163 = vmatprep.subr.mxu0 0.0
    %164 = vmatpush2.msra.mxu0 0.0
    %165 = vmatprep.subr.mxu0 0.0
    %166 = vmatpush2.msra.mxu0 0.0
    %167 = vmatprep.subr.mxu0 0.0
    %168 = vmatpush2.msra.mxu0 0.0
    %169 = vmatprep.subr.mxu0 0.0
    %170 = vmatpush2.msra.mxu0 0.0
    %171 = vmatprep.subr.mxu0 0.0
    %172 = vmatpush2.msra.mxu0 0.0
    %173 = vmatprep.subr.mxu0 0.0
    %174 = vmatpush2.msra.mxu0 0.0
    %175 = vmatprep.subr.mxu0 0.0
    %176 = vmatpush2.msra.mxu0 0.0
    %177 = vmatprep.subr.mxu0 0.0
    %178 = vmatpush2.msra.mxu0 0.0
    %179 = vmatprep.subr.mxu0 0.0
    %180 = vmatpush2.msra.mxu0 0.0
    %181 = vmatprep.subr.mxu0 0.0
    %182 = vmatpush2.msra.mxu0 0.0
    %183 = vmatprep.subr.mxu0 0.0
    %184 = vmatpush2.msra.mxu0 0.0
    %185 = vmatprep.subr.mxu0 0.0
    %186 = vmatpush2.msra.mxu0 0.0
    %187 = vmatprep.subr.mxu0 0.0
    %188 = vmatpush2.msra.mxu0 0.0
    %189 = vmatprep.subr.mxu0 0.0
    %190 = vmatpush2.msra.mxu0 0.0
    %191 = vmatprep.subr.mxu0 0.0
    %192 = vmatpush2.msra.mxu0 0.0
    %193 = vmatprep.mubr.f32.mxu0 0.0
    %194 = vmatmul.mubr.f32.gmra.mxu0 %v105
    %v195 = vpop.f32.mrf.mxu0
    %v196 = vadd.f32 %v127, %v195
    %v197 = vpop.f32.mrf.mxu0
    %198 = vdwg.mxu0
    %vm199 = vcmask 261120
    %200 = vst.msk [vmem:[#allocation2] sm:$0xff] %vm199, %v196
    // Predicated region
    $region22: #{decoder_forward.1} parent=1 // pred_check
      _
    $region23: #{decoder_forward.1} parent=1 // pred_check_branch
      %202 = sbr.rel (0) target = $region25
    $region24: #{decoder_forward.1} parent=1 // pred_region
      %s204 = ssub.s32 128, 128
      %205 = vsyncadd [#allocation3], %s204
      %s207 = sshll.u32 [#allocation2], 4
      %s208 = int_to_ptr.vmem [resolvable:$true] %s207
      %210 = dma.vmem_to_hbm [thread:$0]  %s208, 128, %s5, [#allocation3]
    $region25: #{decoder_forward.1} parent=1 // pred_fallthru
      _
    // Predicated region
    $region26: #{decoder_forward.1} parent=1 // pred_check
      _
    $region27: #{decoder_forward.1} parent=1 // pred_check_branch
      %212 = sbr.rel (0) target = $region29
    $region28: #{decoder_forward.1} parent=1 // pred_region
      %213 = dma.done [#allocation3], 128
    $region29: #{decoder_forward.1} parent=1 // pred_fallthru
      _
    %214 = vsyncpa [#allocation3], 1

</llo_original>
